<compile_context>
chip_gen: v7x
topology: tpu7x:2x2x1
jax: 0.10.0
libtpu: 0.0.40
codegen_flags: <defaults>
</compile_context>

<pallas_src>
import jax
import jax.numpy as jnp
from jax.experimental import pallas as pl
from jax.experimental.pallas import tpu as pltpu


def _total_energy_kernel(y_ref, w_ref, W_ref, out_ref):
    y_in = y_ref[...]                                   # (TN, L), native dtype
    w = w_ref[...].astype(jnp.float32)                  # (1, L)
    # Bilinear part on the MXU, accumulated in f32.
    yW = jnp.dot(y_in, W_ref[...], preferred_element_type=jnp.float32)  # (TN, L)
    y = y_in.astype(jnp.float32)
    # Fused container sum:  e1 + e2 = sum_l y * (yW + w)
    fused = y * (yW + w)                                # single VPU multiply
    out_ref[...] = jnp.sum(fused, axis=-1, keepdims=True)  # single XLU reduce


def structured_score_container(y, w, W):
    """y: (batch, num_samples, num_labels) -> scores (batch, num_samples)."""
    B, S, L = y.shape
    N = B * S

    # No dtype upcast here: mem-bound kernel, keep HBM traffic minimal.
    y2 = y.reshape(N, L)
    w2 = w.reshape(1, L)
    W2 = W

    # Row tile: multiple of 8 sublanes, large enough to pipeline well, small
    # enough that 2 (double-buffer) x TN x 128 (lane-padded) x 4 B stays far
    # under the 32 MiB scoped-VMEM budget (v7x-safe): TN=2048 -> ~2 MiB.
    TN = N if N <= 2048 else 2048
    grid = (pl.cdiv(N, TN),)

    itemsize = jnp.dtype(y2.dtype).itemsize
    cost = pl.CostEstimate(
        flops=2 * N * L * L + 4 * N * L,
        transcendentals=0,
        bytes_accessed=(N * L * itemsize
                        + L * L * jnp.dtype(W2.dtype).itemsize
                        + L * jnp.dtype(w2.dtype).itemsize
                        + N * 4),
    )

    out = pl.pallas_call(
        _total_energy_kernel,
        out_shape=jax.ShapeDtypeStruct((N, 1), jnp.float32),
        grid=grid,
        in_specs=[
            pl.BlockSpec((TN, L), lambda i: (i, 0)),   # tiled, double-buffered
            pl.BlockSpec((1, L), lambda i: (0, 0)),    # resident
            pl.BlockSpec((L, L), lambda i: (0, 0)),    # resident
        ],
        out_specs=pl.BlockSpec((TN, 1), lambda i: (i, 0)),
        compiler_params=pltpu.CompilerParams(
            dimension_semantics=("parallel",),
            vmem_limit_bytes=32 * 1024 * 1024,
        ),
        cost_estimate=cost,
    )(y2, w2, W2)

    return out.reshape(B, S)


def _reference(y, w, W):
    yf = y.astype(jnp.float32)
    e1 = jnp.einsum("bsl,l->bs", yf, w.astype(jnp.float32))
    e2 = jnp.einsum("bsl,lm,bsm->bs", yf, W.astype(jnp.float32), yf)
    return e1 + e2


if __name__ == "__main__":
    batch, num_samples, num_labels = 2, 8, 32

    key = jax.random.PRNGKey(0)
    ky, kw, kW = jax.random.split(key, 3)

    y = jax.random.uniform(ky, (batch, num_samples, num_labels), jnp.float32)
    # deterministic synthetic parameters for the two constituent energies
    w = jax.random.normal(kw, (num_labels,), jnp.float32) * 0.1
    W = jax.random.normal(kW, (num_labels, num_labels), jnp.float32) * 0.05

    scores = structured_score_container(y, w, W)
    scores = jax.block_until_ready(scores)

    ref = _reference(y, w, W)
    assert scores.shape == (batch, num_samples)
    assert jnp.allclose(scores, ref, atol=1e-4, rtol=1e-4), (scores, ref)

    print("KERNEL_OK")
</pallas_src>

<mosaic_0001>
module attributes {stable_mosaic.version = 11 : i64} {
  func.func @_total_energy_kernel(%arg0: i32, %arg1: memref<16x32xf32, #tpu.memory_space<vmem>>, %arg2: memref<1x32xf32, #tpu.memory_space<vmem>>, %arg3: memref<32x32xf32, #tpu.memory_space<vmem>>, %arg4: memref<16x1xf32, #tpu.memory_space<vmem>>) attributes {dimension_semantics = [#tpu.dimension_semantics<parallel>], iteration_bounds = array<i64: 1>, scalar_prefetch = 0 : i64, scratch_operands = 0 : i64, tpu.core_type = #tpu.core_type<tc>, window_params = [{transform_indices = @transform_0, window_bounds = array<i64: 16, 32>}, {pipeline_mode = #tpu.pipeline_mode<synchronous>, transform_indices = @transform_1, window_bounds = array<i64: 1, 32>}, {pipeline_mode = #tpu.pipeline_mode<synchronous>, transform_indices = @transform_2, window_bounds = array<i64: 32, 32>}, {transform_indices = @transform_3, window_bounds = array<i64: 16, 1>}]} {
    %c0 = arith.constant 0 : index
    %c0_0 = arith.constant 0 : index
    %0 = vector.load %arg1[%c0, %c0_0] : memref<16x32xf32, #tpu.memory_space<vmem>>, vector<16x32xf32>
    %c0_1 = arith.constant 0 : index
    %c0_2 = arith.constant 0 : index
    %1 = vector.load %arg2[%c0_1, %c0_2] : memref<1x32xf32, #tpu.memory_space<vmem>>, vector<1x32xf32>
    %c0_3 = arith.constant 0 : index
    %c0_4 = arith.constant 0 : index
    %2 = vector.load %arg3[%c0_3, %c0_4] : memref<32x32xf32, #tpu.memory_space<vmem>>, vector<32x32xf32>
    %cst = arith.constant dense<0.000000e+00> : vector<16x32xf32>
    %3 = tpu.matmul %0, %2, %cst {dimension_numbers = #tpu.dot_dimension_numbers<[1], [0], [0], [1], [0, 0, 1, 1], [], []>} : vector<16x32xf32>, vector<32x32xf32>, vector<16x32xf32> -> vector<16x32xf32>
    %4 = vector.broadcast %1 : vector<1x32xf32> to vector<16x32xf32>
    %5 = arith.addf %3, %4 : vector<16x32xf32>
    %6 = arith.mulf %0, %5 : vector<16x32xf32>
    %cst_5 = arith.constant dense<0.000000e+00> : vector<16xf32>
    %7 = vector.multi_reduction <add>, %6, %cst_5 [1] : vector<16x32xf32> to vector<16xf32>
    %8 = vector.shape_cast %7 : vector<16xf32> to vector<16x1xf32>
    %c0_6 = arith.constant 0 : index
    %c0_7 = arith.constant 0 : index
    %9 = vector.load %arg4[%c0_6, %c0_7] : memref<16x1xf32, #tpu.memory_space<vmem>>, vector<16x1xf32>
    tpu.vector_store %arg4[%c0_6, %c0_7], %8 {strides = array<i32>} : memref<16x1xf32, #tpu.memory_space<vmem>>, vector<16x1xf32>,
    return
  }
  func.func @transform_0(%arg0: i32) -> (i32, i32) {
    %c0_i32 = arith.constant 0 : i32
    %c0_i32_0 = arith.constant 0 : i32
    return %arg0, %c0_i32 : i32, i32
  }
  func.func @transform_1(%arg0: i32) -> (i32, i32) {
    %c0_i32 = arith.constant 0 : i32
    %c0_i32_0 = arith.constant 0 : i32
    %c0_i32_1 = arith.constant 0 : i32
    return %c0_i32, %c0_i32_0 : i32, i32
  }
  func.func @transform_2(%arg0: i32) -> (i32, i32) {
    %c0_i32 = arith.constant 0 : i32
    %c0_i32_0 = arith.constant 0 : i32
    %c0_i32_1 = arith.constant 0 : i32
    return %c0_i32, %c0_i32_0 : i32, i32
  }
  func.func @transform_3(%arg0: i32) -> (i32, i32) {
    %c0_i32 = arith.constant 0 : i32
    %c0_i32_0 = arith.constant 0 : i32
    return %arg0, %c0_i32 : i32, i32
  }
}

</mosaic_0001>

<llo_original>
// kernel: tpu_custom_call.1
$region0: #{tpu_custom_call.1}
  #allocation0 [shape = 'u32[]', space=smem, size = 0x4, offset = 0x4, fixed_abs, tag = 'smem constant byte address 0x4 - core index']
  #allocation1 [shape = 'u32[144,128]{1,0:T(1,128)}', space=vmem, size = 0x12000, scoped, tag = 'internal scratch']
  %s0 = inlined_call_operand.hbm [shape: f32[16,32], index: 0, kind: input, shape index: {}]
  %s1 = inlined_call_operand.vmem [shape: f32[1,32], index: 1, kind: input, shape index: {}]
  %s2 = inlined_call_operand.hbm [shape: f32[32,32], index: 2, kind: input, shape index: {}]
  %s3 = inlined_call_operand.vmem [shape: f32[16,1], index: 3, kind: output, shape index: {}]
  %s4 = sld [smem:[#allocation0]]
  $region30: #{tpu_custom_call.1} parent=0
    _
  %s6 = ssub.s32 1, %s4
  %s7 = scalar_select 0, %s6, %s4
  $region1: #{tpu_custom_call.1} parent=0
    #allocation2 [shape = 'u8[8192]{0}', space=vmem, size = 0x2000, scoped, tag = 'input window, operand 0, single buffered']
    #allocation3 [shape = 's32[1]{0}', space=sflag, size = 0x4, scoped, tag = 'scoped memory for tpu_custom_call.1']
    #allocation4 [shape = 'u8[16384]{0}', space=vmem, size = 0x4000, scoped, tag = 'input window, operand 2, single buffered']
    #allocation5 [shape = 's32[1]{0}', space=sflag, size = 0x4, scoped, tag = 'scoped memory for tpu_custom_call.1']
    %8 = vsyncpa [#allocation3], 0
    %9 = vsyncpa [#allocation5], 0
    // Predicated region
    $region2: #{tpu_custom_call.1} parent=1 // pred_check
      _
    $region3: #{tpu_custom_call.1} parent=1 // pred_check_branch
      %11 = sbr.rel (0) target = $region5
    $region4: #{tpu_custom_call.1} parent=1 // pred_region
      %s13 = ssub.s32 256, 256
      %14 = vsyncadd [#allocation3], %s13
      %s15 = sshll.u32 [#allocation2], 4
      %s16 = int_to_ptr.vmem [resolvable:$true] %s15
      %21 = dma.hbm_to_vmem [thread:$0]  %s0, 256, %s16, [#allocation3], 128, 128, 8
    $region5: #{tpu_custom_call.1} parent=1 // pred_fallthru
      _
    // Predicated region
    $region6: #{tpu_custom_call.1} parent=1 // pred_check
      _
    $region7: #{tpu_custom_call.1} parent=1 // pred_check_branch
      %23 = sbr.rel (0) target = $region9
    $region8: #{tpu_custom_call.1} parent=1 // pred_region
      _
    $region9: #{tpu_custom_call.1} parent=1 // pred_fallthru
      _
    // Predicated region
    $region10: #{tpu_custom_call.1} parent=1 // pred_check
      _
    $region11: #{tpu_custom_call.1} parent=1 // pred_check_branch
      %25 = sbr.rel (0) target = $region13
    $region12: #{tpu_custom_call.1} parent=1 // pred_region
      %s27 = ssub.s32 512, 512
      %28 = vsyncadd [#allocation5], %s27
      %s29 = sshll.u32 [#allocation4], 4
      %s30 = int_to_ptr.vmem [resolvable:$true] %s29
      %35 = dma.hbm_to_vmem [thread:$0]  %s2, 512, %s30, [#allocation5], 128, 128, 8
    $region13: #{tpu_custom_call.1} parent=1 // pred_fallthru
      _
    // Predicated region
    $region14: #{tpu_custom_call.1} parent=1 // pred_check
      _
    $region15: #{tpu_custom_call.1} parent=1 // pred_check_branch
      %37 = sbr.rel (0) target = $region17
    $region16: #{tpu_custom_call.1} parent=1 // pred_region
      %38 = dma.done [#allocation3], 256
    $region17: #{tpu_custom_call.1} parent=1 // pred_fallthru
      _
    // Predicated region
    $region18: #{tpu_custom_call.1} parent=1 // pred_check
      _
    $region19: #{tpu_custom_call.1} parent=1 // pred_check_branch
      %40 = sbr.rel (0) target = $region21
    $region20: #{tpu_custom_call.1} parent=1 // pred_region
      %41 = dma.done [#allocation5], 512
    $region21: #{tpu_custom_call.1} parent=1 // pred_fallthru
      _
    %v42 = vld [vmem:[#allocation2] sm:$0xff]
    %v43 = vld [vmem:[#allocation2 + $0x8] sm:$0xff]
    %v44 = vld [vmem:[%s1] sm:$0x1]
    %v45 = vld [vmem:[#allocation4] sm:$0xff]
    %v46 = vld [vmem:[#allocation4 + $0x8] sm:$0xff]
    %v47 = vld [vmem:[#allocation4 + $0x10] sm:$0xff]
    %v48 = vld [vmem:[#allocation4 + $0x18] sm:$0xff]
    %v50 = vlaneseq
    %v51 = vshrl.u32 %v50, 7
    %v52 = vsub.s32 0, %v51
    %v53 = vrot.slane %v44, %v52
    %vm55 = vcmask 261120
    %v57 = vsel %vm55, %v42, 0
    %v60 = vsel %vm55, %v43, 0
    %62 = vmatprep.subr.mxu0 0.0
    %63 = vmatpush1.msra.mxu0 %v45
    %64 = vmatprep.subr.mxu0 0.0
    %65 = vmatpush1.msra.mxu0 %v46
    %66 = vmatprep.subr.mxu0 0.0
    %67 = vmatpush1.msra.mxu0 %v47
    %68 = vmatprep.subr.mxu0 0.0
    %69 = vmatpush1.msra.mxu0 %v48
    %70 = vmatprep.subr.mxu0 0.0
    %71 = vmatpush1.msra.mxu0 0.0
    %72 = vmatprep.subr.mxu0 0.0
    %73 = vmatpush1.msra.mxu0 0.0
    %74 = vmatprep.subr.mxu0 0.0
    %75 = vmatpush1.msra.mxu0 0.0
    %76 = vmatprep.subr.mxu0 0.0
    %77 = vmatpush1.msra.mxu0 0.0
    %78 = vmatprep.subr.mxu0 0.0
    %79 = vmatpush1.msra.mxu0 0.0
    %80 = vmatprep.subr.mxu0 0.0
    %81 = vmatpush1.msra.mxu0 0.0
    %82 = vmatprep.subr.mxu0 0.0
    %83 = vmatpush1.msra.mxu0 0.0
    %84 = vmatprep.subr.mxu0 0.0
    %85 = vmatpush1.msra.mxu0 0.0
    %86 = vmatprep.subr.mxu0 0.0
    %87 = vmatpush1.msra.mxu0 0.0
    %88 = vmatprep.subr.mxu0 0.0
    %89 = vmatpush1.msra.mxu0 0.0
    %90 = vmatprep.subr.mxu0 0.0
    %91 = vmatpush1.msra.mxu0 0.0
    %92 = vmatprep.subr.mxu0 0.0
    %93 = vmatpush1.msra.mxu0 0.0
    %94 = vmatprep.subr.mxu0 0.0
    %95 = vmatpush1.msra.mxu0 0.0
    %96 = vmatprep.subr.mxu0 0.0
    %97 = vmatpush1.msra.mxu0 0.0
    %98 = vmatprep.subr.mxu0 0.0
    %99 = vmatpush1.msra.mxu0 0.0
    %100 = vmatprep.subr.mxu0 0.0
    %101 = vmatpush1.msra.mxu0 0.0
    %102 = vmatprep.subr.mxu0 0.0
    %103 = vmatpush1.msra.mxu0 0.0
    %104 = vmatprep.subr.mxu0 0.0
    %105 = vmatpush1.msra.mxu0 0.0
    %106 = vmatprep.subr.mxu0 0.0
    %107 = vmatpush1.msra.mxu0 0.0
    %108 = vmatprep.subr.mxu0 0.0
    %109 = vmatpush1.msra.mxu0 0.0
    %110 = vmatprep.subr.mxu0 0.0
    %111 = vmatpush1.msra.mxu0 0.0
    %112 = vmatprep.subr.mxu0 0.0
    %113 = vmatpush1.msra.mxu0 0.0
    %114 = vmatprep.subr.mxu0 0.0
    %115 = vmatpush1.msra.mxu0 0.0
    %116 = vmatprep.subr.mxu0 0.0
    %117 = vmatpush1.msra.mxu0 0.0
    %118 = vmatprep.subr.mxu0 0.0
    %119 = vmatpush1.msra.mxu0 0.0
    %120 = vmatprep.subr.mxu0 0.0
    %121 = vmatpush1.msra.mxu0 0.0
    %122 = vmatprep.subr.mxu0 0.0
    %123 = vmatpush1.msra.mxu0 0.0
    %124 = vmatprep.subr.mxu0 0.0
    %125 = vmatpush1.msra.mxu0 0.0
    %126 = vmatprep.mubr.f32.mxu0 0.0
    %127 = vmatmul.mubr.f32.gmra.mrb[0].mxu0 %v57
    %v128 = vpop.f32.mrb[0].mxu0
    %v129 = vadd.f32 %v53, %v128
    %v130 = vpop.f32.mrb[0].mxu0
    %131 = vmatprep.mubr.f32.mxu0 0.0
    %132 = vmatmul.mubr.f32.gmra.mrb[0].mxu0 %v60
    %v133 = vpop.f32.mrb[0].mxu0
    %v134 = vadd.f32 %v53, %v133
    %v135 = vpop.f32.mrb[0].mxu0
    %136 = vdwg.mxu0
    %v137 = vmul.f32 %v42, %v129
    %v138 = vmul.f32 %v43, %v134
    %v139 = vsel %vm55, %v137, 0.0
    %140 = vadd.xlane.f32.xlu0 %v139
    %v141 = vpop.xlane.xlu0 %140
    %v142 = vsel %vm55, %v138, 0.0
    %143 = vadd.xlane.f32.xlu0 %v142
    %v144 = vpop.xlane.xlu0 %143
    %vm145 = vcmask 7168
    %146 = vst.msk [vmem:[%s3] sm:$0xff] %vm145, %v141
    %147 = vst.msk [vmem:[%s3 + $0x8] sm:$0xff] %vm145, %v144
    // Predicated region
    $region22: #{tpu_custom_call.1} parent=1 // pred_check
      _
    $region23: #{tpu_custom_call.1} parent=1 // pred_check_branch
      %149 = sbr.rel (0) target = $region25
    $region24: #{tpu_custom_call.1} parent=1 // pred_region
      _
    $region25: #{tpu_custom_call.1} parent=1 // pred_fallthru
      _
    // Predicated region
    $region26: #{tpu_custom_call.1} parent=1 // pred_check
      _
    $region27: #{tpu_custom_call.1} parent=1 // pred_check_branch
      %151 = sbr.rel (0) target = $region29
    $region28: #{tpu_custom_call.1} parent=1 // pred_region
      _
    $region29: #{tpu_custom_call.1} parent=1 // pred_fallthru
      _
    %152 = vsyncpa [#allocation3], 1
    %153 = vsyncpa [#allocation5], 1

</llo_original>
